<compile_context>
chip_gen: v5e
topology: v5e:2x2
jax: 0.10.0
libtpu: 0.0.40
codegen_flags: <defaults>
</compile_context>

<pallas_src>
import jax
import jax.numpy as jnp
from jax.experimental import pallas as pl
from jax.experimental.pallas import tpu as pltpu


_LANE = 128
_LANE_TARGET = 2048                    # lane-dense tile width for large H*W
_TARGET_TILE_BYTES = 4 * 1024 * 1024   # ~4 MiB per block (85%+ of HBM roofline)
_VMEM_LIMIT_BYTES = 32 * 1024 * 1024   # safe on v5e/v6e (128 MiB) and v7x (64 MiB)


def _dropout2d_kernel(keep_ref, x_ref, o_ref):
    # keep_ref: (block_rows, 1) per-channel factor, already 0 or 1/(1-p).
    # Single broadcast multiply per element; lane-dense stores.
    o_ref[...] = x_ref[...] * keep_ref[...]


def _sublane_for(dtype):
    # f32 -> 8, bf16 -> 16, int8/fp8 -> 32 (sublane packing of sub-32-bit dtypes).
    return max(8, 32 // jnp.dtype(dtype).itemsize)


def _pick_blocks(rows, cols, dtype):
    itemsize = jnp.dtype(dtype).itemsize
    sub = _sublane_for(dtype)

    # Lane axis: full width when small (full-extent blocks are always legal,
    # even unaligned), else a lane-dense 2048-wide (multiple-of-128) tile;
    # a ragged trailing block is fine for this elementwise op.
    bc = cols if cols <= _LANE_TARGET else _LANE_TARGET

    # Sublane axis: as many rows as fit the per-block byte budget.
    max_br = max(sub, (_TARGET_TILE_BYTES // (bc * itemsize)) // sub * sub)
    br = rows if rows <= max_br else max_br
    return br, bc


def graph_dropout2d(x, *, p, seed, training=True):
    """Equivalent of GraphDropout2d.forward applied to `input.x` (NCHW)."""
    # TODO(synk): the PyG `Batch` container itself (mutating input.x in place)
    # has no Pallas equivalent; this operates on the raw node-feature array.
    if not training or p == 0.0:
        return x                       # identity in eval mode / p == 0
    if p >= 1.0:
        return jnp.zeros_like(x)       # avoid inf scale; everything dropped

    N, C, H, W = x.shape
    rows, cols = N * C, H * W

    scale = 1.0 / (1.0 - p)
    # Per-channel Bernoulli keep decision: tiny (rows, 1) array computed once in
    # plain JAX; scale folded in so the kernel does a single multiply/element.
    key = jax.random.PRNGKey(seed)
    keep = jax.random.bernoulli(key, 1.0 - p, (rows, 1))
    keep_scaled = jnp.where(
        keep, jnp.asarray(scale, x.dtype), jnp.asarray(0.0, x.dtype)
    ).astype(x.dtype)

    br, bc = _pick_blocks(rows, cols, x.dtype)
    grid = (pl.cdiv(rows, br), pl.cdiv(cols, bc))

    x2 = x.reshape(rows, cols)
    out2 = pl.pallas_call(
        _dropout2d_kernel,
        out_shape=jax.ShapeDtypeStruct((rows, cols), x.dtype),
        grid=grid,
        in_specs=[
            pl.BlockSpec((br, 1), lambda i, j: (i, 0)),     # per-row keep factor
            pl.BlockSpec((br, bc), lambda i, j: (i, j)),    # input slab
        ],
        out_specs=pl.BlockSpec((br, bc), lambda i, j: (i, j)),
        compiler_params=pltpu.CompilerParams(
            dimension_semantics=("parallel", "parallel"),
            vmem_limit_bytes=_VMEM_LIMIT_BYTES,
        ),
    )(keep_scaled, x2)

    return out2.reshape(N, C, H, W)


if __name__ == "__main__":
    key = jax.random.PRNGKey(0)
    N, C, H, W = 2, 4, 16, 16
    p = 0.5

    # `input.x` of the PyG batch: node/feature tensor in NCHW conv layout.
    x = jax.random.normal(key, (N, C, H, W), dtype=jnp.float32)

    y = graph_dropout2d(x, p=p, seed=0, training=True)
    y = jax.block_until_ready(y)

    # --- semantic check: every (H, W) channel map is either all-zero or x/(1-p)
    scale = 1.0 / (1.0 - p)
    y2 = y.reshape(N * C, H * W)
    x2 = x.reshape(N * C, H * W)
    dropped = jnp.all(y2 == 0.0, axis=1)
    kept_ok = jnp.max(jnp.abs(y2 - x2 * scale), axis=1) < 1e-5
    per_channel_ok = jnp.logical_or(dropped, kept_ok)
    assert bool(jnp.all(per_channel_ok)), "channel-wise dropout semantics violated"

    # ragged (non tile-aligned) shape also works now (rows=6, cols=9*13=117)
    x_r = jax.random.normal(jax.random.PRNGKey(1), (2, 3, 9, 13), dtype=jnp.float32)
    y_r = jax.block_until_ready(graph_dropout2d(x_r, p=p, seed=3, training=True))
    y_r2 = y_r.reshape(6, 117)
    x_r2 = x_r.reshape(6, 117)
    ok_r = jnp.logical_or(
        jnp.all(y_r2 == 0.0, axis=1),
        jnp.max(jnp.abs(y_r2 - x_r2 * scale), axis=1) < 1e-5,
    )
    assert bool(jnp.all(ok_r)), "ragged-shape dropout semantics violated"

    # eval mode is identity
    y_eval = graph_dropout2d(x, p=p, seed=0, training=False)
    assert bool(jnp.all(y_eval == x))

    # p >= 1 drops everything
    y_all = graph_dropout2d(x, p=1.0, seed=0, training=True)
    assert bool(jnp.all(y_all == 0.0))

    print("KERNEL_OK")
</pallas_src>

<mosaic_0001>
module attributes {stable_mosaic.version = 11 : i64} {
  func.func @_dropout2d_kernel(%arg0: i32, %arg1: i32, %arg2: memref<8x1xf32, #tpu.memory_space<vmem>>, %arg3: memref<8x256xf32, #tpu.memory_space<vmem>>, %arg4: memref<8x256xf32, #tpu.memory_space<vmem>>) attributes {dimension_semantics = [#tpu.dimension_semantics<parallel>, #tpu.dimension_semantics<parallel>], iteration_bounds = array<i64: 1, 1>, scalar_prefetch = 0 : i64, scratch_operands = 0 : i64, tpu.core_type = #tpu.core_type<tc>, window_params = [{transform_indices = @transform_0, window_bounds = array<i64: 8, 1>}, {transform_indices = @transform_1, window_bounds = array<i64: 8, 256>}, {transform_indices = @transform_2, window_bounds = array<i64: 8, 256>}]} {
    %c0 = arith.constant 0 : index
    %c0_0 = arith.constant 0 : index
    %0 = vector.load %arg3[%c0, %c0_0] : memref<8x256xf32, #tpu.memory_space<vmem>>, vector<8x256xf32>
    %c0_1 = arith.constant 0 : index
    %c0_2 = arith.constant 0 : index
    %1 = vector.load %arg2[%c0_1, %c0_2] : memref<8x1xf32, #tpu.memory_space<vmem>>, vector<8x1xf32>
    %2 = vector.broadcast %1 : vector<8x1xf32> to vector<8x256xf32>
    %3 = arith.mulf %0, %2 : vector<8x256xf32>
    %c0_3 = arith.constant 0 : index
    %c0_4 = arith.constant 0 : index
    %4 = vector.load %arg4[%c0_3, %c0_4] : memref<8x256xf32, #tpu.memory_space<vmem>>, vector<8x256xf32>
    tpu.vector_store %arg4[%c0_3, %c0_4], %3 {strides = array<i32>} : memref<8x256xf32, #tpu.memory_space<vmem>>, vector<8x256xf32>,
    return
  }
  func.func @transform_0(%arg0: i32, %arg1: i32) -> (i32, i32) {
    %c0_i32 = arith.constant 0 : i32
    %c0_i32_0 = arith.constant 0 : i32
    return %arg0, %c0_i32 : i32, i32
  }
  func.func @transform_1(%arg0: i32, %arg1: i32) -> (i32, i32) {
    %c0_i32 = arith.constant 0 : i32
    return %arg0, %arg1 : i32, i32
  }
  func.func @transform_2(%arg0: i32, %arg1: i32) -> (i32, i32) {
    %c0_i32 = arith.constant 0 : i32
    return %arg0, %arg1 : i32, i32
  }
}

</mosaic_0001>

<llo_original>
// kernel: tpu_custom_call.1
$region0: #{tpu_custom_call.1}
  #allocation0 [shape = 'u32[]', space=smem, size = 0x4, offset = 0x4, fixed_abs, tag = 'smem constant byte address 0x4 - core index']
  #allocation1 [shape = 'u32[72,128]{1,0:T(1,128)}', space=vmem, size = 0x9000, scoped, tag = 'internal scratch']
  %s0 = inlined_call_operand.vmem [shape: f32[8,1], index: 0, kind: input, shape index: {}]
  %s1 = inlined_call_operand.hbm [shape: f32[8,256], index: 1, kind: input, shape index: {}]
  %s2 = inlined_call_operand.hbm [shape: f32[8,256], index: 2, kind: output, shape index: {}]
  %s3 = sld [smem:[#allocation0]]
  $region22: #{tpu_custom_call.1} parent=0
    _
  %s5 = ssub.s32 1, %s3
  %s6 = scalar_select 0, %s5, %s3
  $region1: #{tpu_custom_call.1} parent=0
    #allocation2 [shape = 'u8[8192]{0}', space=vmem, size = 0x2000, scoped, tag = 'input window, operand 1, single buffered']
    #allocation3 [shape = 's32[1]{0}', space=sflag, size = 0x4, scoped, tag = 'scoped memory for tpu_custom_call.1']
    #allocation4 [shape = 's32[1]{0}', space=sflag, size = 0x4, scoped, tag = 'scoped memory for tpu_custom_call.1']
    #allocation5 [shape = 'u8[8192]{0}', space=vmem, size = 0x2000, scoped, tag = 'output window, operand 0, single buffered']
    %7 = vsyncpa [#allocation3], 0
    %8 = vsyncpa [#allocation4], 0
    // Predicated region
    $region2: #{tpu_custom_call.1} parent=1 // pred_check
      _
    $region3: #{tpu_custom_call.1} parent=1 // pred_check_branch
      %10 = sbr.rel (0) target = $region5
    $region4: #{tpu_custom_call.1} parent=1 // pred_region
      _
    $region5: #{tpu_custom_call.1} parent=1 // pred_fallthru
      _
    // Predicated region
    $region6: #{tpu_custom_call.1} parent=1 // pred_check
      _
    $region7: #{tpu_custom_call.1} parent=1 // pred_check_branch
      %12 = sbr.rel (0) target = $region9
    $region8: #{tpu_custom_call.1} parent=1 // pred_region
      %14 = vsyncadd [#allocation3], 0
      %s16 = sshll.u32 %s1, 4
      %s17 = int_to_ptr.hbm [resolvable:$true] %s16
      %s18 = sshll.u32 [#allocation2], 4
      %s19 = int_to_ptr.vmem [resolvable:$true] %s18
      %21 = dma.hbm_to_vmem [thread:$0]  %s17, 256, %s19, [#allocation3]
    $region9: #{tpu_custom_call.1} parent=1 // pred_fallthru
      _
    // Predicated region
    $region10: #{tpu_custom_call.1} parent=1 // pred_check
      _
    $region11: #{tpu_custom_call.1} parent=1 // pred_check_branch
      %23 = sbr.rel (0) target = $region13
    $region12: #{tpu_custom_call.1} parent=1 // pred_region
      %25 = dma.done [#allocation3], 256
    $region13: #{tpu_custom_call.1} parent=1 // pred_fallthru
      _
    %v26 = vld [vmem:[#allocation2] sm:$0xff]
    %v27 = vld [vmem:[#allocation2 + $0x8] sm:$0xff]
    %v28 = vld [vmem:[%s0] sm:$0xff]
    %30 = vset.pattern.permute.xlu0 0
    %31 = vperm.xlu0 %30, %v28
    %v32 = vpop.permute.xlu0 %31
    %v34 = vmul.f32 %v26, %v32
    %v35 = vmul.f32 %v27, %v32
    %36 = vst [vmem:[#allocation5] sm:$0xff] %v34
    %37 = vst [vmem:[#allocation5 + $0x8] sm:$0xff] %v35
    // Predicated region
    $region14: #{tpu_custom_call.1} parent=1 // pred_check
      _
    $region15: #{tpu_custom_call.1} parent=1 // pred_check_branch
      %39 = sbr.rel (0) target = $region17
    $region16: #{tpu_custom_call.1} parent=1 // pred_region
      %41 = vsyncadd [#allocation4], 0
      %s43 = sshll.u32 [#allocation5], 4
      %s44 = int_to_ptr.vmem [resolvable:$true] %s43
      %s45 = sshll.u32 %s2, 4
      %s46 = int_to_ptr.hbm [resolvable:$true] %s45
      %48 = dma.vmem_to_hbm [thread:$0]  %s44, 256, %s46, [#allocation4]
    $region17: #{tpu_custom_call.1} parent=1 // pred_fallthru
      _
    // Predicated region
    $region18: #{tpu_custom_call.1} parent=1 // pred_check
      _
    $region19: #{tpu_custom_call.1} parent=1 // pred_check_branch
      %50 = sbr.rel (0) target = $region21
    $region20: #{tpu_custom_call.1} parent=1 // pred_region
      %52 = dma.done [#allocation4], 256
    $region21: #{tpu_custom_call.1} parent=1 // pred_fallthru
      _
    %53 = vsyncpa [#allocation3], 1
    %54 = vsyncpa [#allocation4], 1

</llo_original>
